<compile_context>
chip_gen: v5e
topology: v5e:2x2
jax: 0.10.0
libtpu: 0.0.40
codegen_flags: <defaults>
</compile_context>

<pallas_src>
import jax
import jax.numpy as jnp
from jax import lax
from jax.experimental import pallas as pl
from jax.experimental.pallas import tpu as pltpu


def pooler_kernel(x_ref, w_ref, b_ref, o_ref, acc_ref):
    # x_ref:   [tb, tk]  first-token hidden states (K slice)
    # w_ref:   [tn, tk]  nn.Linear weight, native (out, in) layout (K slice)
    # b_ref:   [1,  tn]  bias slice
    # o_ref:   [tb, tn]  output tile
    # acc_ref: [tb, tn]  f32 accumulator scratch (lives across the K axis)
    k = pl.program_id(2)

    @pl.when(k == 0)
    def _init():
        acc_ref[...] = jnp.zeros_like(acc_ref)

    # x @ w.T without materializing a transpose: contract last dims of both.
    acc_ref[...] += lax.dot_general(
        x_ref[...],
        w_ref[...],
        dimension_numbers=(((1,), (1,)), ((), ())),
        preferred_element_type=jnp.float32,
    )

    @pl.when(k == pl.num_programs(2) - 1)
    def _finalize():
        z = acc_ref[...] + b_ref[...].astype(jnp.float32)
        o_ref[...] = jnp.tanh(z).astype(o_ref.dtype)


def _aligned_divisors(dim, align):
    """Tile candidates for `dim`, largest first: the full dim, plus every
    divisor of `dim` that is a multiple of `align` (legal TPU block sizes)."""
    cands = [dim]
    if dim % align == 0:
        t = dim - align
        while t >= align:
            if dim % t == 0:
                cands.append(t)
            t -= align
    return cands


def _vmem_info():
    """(physical VMEM bytes, tile-sizing budget)."""
    try:
        cap = int(pltpu.get_tpu_info().vmem_capacity_bytes)
    except Exception:
        cap = 64 * 1024 * 1024  # conservative: v7x has 64 MiB per TensorCore
    return cap, int(cap * 0.60)


def _choose_tiles(B, H, x_it, w_it, o_it, budget):
    """Pick (tb, tn, tk) from a dtype-aware VMEM budget (double-buffered)."""
    # Output-lane tile: lane-aligned; ~512-wide tiles sit near the HBM
    # roofline; prefer >= 2 tiles over H_out so both v7x TensorCores get work.
    tn = H
    if H % 128 == 0:
        for cand in (512, 256, 128):
            if H % cand == 0 and H // cand >= 2:
                tn = cand
                break

    def usage(tb, tk):
        return (2 * tn * tk * w_it      # weight tile, double-buffered
                + 2 * tb * tk * x_it    # x tile, double-buffered
                + 2 * tb * tn * o_it    # output tile, double-buffered
                + 2 * tn * 4            # bias tile
                + tb * tn * 4)          # f32 accumulator scratch

    # Prefer collapsing the batch axis (x and weight each streamed exactly
    # once from HBM); shrink the K tile before shrinking the batch tile.
    for tb in _aligned_divisors(B, 8):
        for tk in _aligned_divisors(H, 128):
            if usage(tb, tk) <= budget:
                return tb, tn, tk
    # Nothing fits the budget: fall back to the smallest legal tiles.
    return _aligned_divisors(B, 8)[-1], tn, _aligned_divisors(H, 128)[-1]


def pooler_forward(inp, weight, bias):
    """Pooler: tanh(input[:, 0] @ weight.T + bias).

    inp:    [B, S, H]   hidden states
    weight: [H, H]      nn.Linear weight, torch layout (out_features, in_features)
    bias:   [H]
    returns [B, H]
    """
    B, S, H = inp.shape

    # First-token select stays as (tiny) wrapper glue.
    x0 = inp[:, 0, :]            # [B, H]
    b2d = bias.reshape(1, H)     # 2-D, lane-major bias

    x_it = jnp.dtype(x0.dtype).itemsize
    w_it = jnp.dtype(weight.dtype).itemsize
    b_it = jnp.dtype(bias.dtype).itemsize
    o_it = jnp.dtype(inp.dtype).itemsize

    cap, budget = _vmem_info()
    tb, tn, tk = _choose_tiles(B, H, x_it, w_it, o_it, budget)
    nb, nn, nk = B // tb, H // tn, H // tk

    # Grid ordering: K (reduction) innermost.  For the outer two axes, when
    # the batch is tiled, pick the order whose redundant HBM stream is
    # cheaper: batch-outer re-reads the weight nb times, n-outer re-reads x
    # nn times.  With the batch collapsed (nb == 1) batch-outer reads both
    # exactly once.
    extra_x = (nn - 1) * B * H * x_it   # n-outer / batch-inner order
    extra_w = (nb - 1) * H * H * w_it   # batch-outer / n-inner order
    batch_outer = extra_w <= extra_x

    if batch_outer:
        grid = (nb, nn, nk)
        x_spec = pl.BlockSpec((tb, tk), lambda b, n, k: (b, k))
        w_spec = pl.BlockSpec((tn, tk), lambda b, n, k: (n, k))
        bias_spec = pl.BlockSpec((1, tn), lambda b, n, k: (0, n))
        out_spec = pl.BlockSpec((tb, tn), lambda b, n, k: (b, n))
    else:
        grid = (nn, nb, nk)
        x_spec = pl.BlockSpec((tb, tk), lambda n, b, k: (b, k))
        w_spec = pl.BlockSpec((tn, tk), lambda n, b, k: (n, k))
        bias_spec = pl.BlockSpec((1, tn), lambda n, b, k: (0, n))
        out_spec = pl.BlockSpec((tb, tn), lambda n, b, k: (b, n))

    cost = pl.CostEstimate(
        flops=2 * B * H * H,
        transcendentals=B * H,                    # tanh
        bytes_accessed=(B * H * x_it              # x0
                        + H * H * w_it            # weight (read once)
                        + H * b_it                # bias
                        + B * H * o_it),          # out
    )

    return pl.pallas_call(
        pooler_kernel,
        out_shape=jax.ShapeDtypeStruct((B, H), inp.dtype),
        grid=grid,
        in_specs=[x_spec, w_spec, bias_spec],
        out_specs=out_spec,
        scratch_shapes=[pltpu.VMEM((tb, tn), jnp.float32)],
        compiler_params=pltpu.CompilerParams(
            # first two axes independent (megacore / v7x 2nd TC), K is the
            # reduction -> arbitrary and innermost.
            dimension_semantics=("parallel", "parallel", "arbitrary"),
            vmem_limit_bytes=int(cap * 0.85),
        ),
        cost_estimate=cost,
    )(x0, weight, b2d)


if __name__ == "__main__":
    # Small shapes consistent with the module: batch=2, seq=8, hidden=32
    B, S, H = 2, 8, 32
    key = jax.random.PRNGKey(0)
    k_x, k_w, k_b = jax.random.split(key, 3)

    x = jax.random.normal(k_x, (B, S, H), dtype=jnp.float32)
    # Deterministic parameter init (synthetic; mimics nn.Linear scale ~1/sqrt(H))
    weight = jax.random.uniform(k_w, (H, H), dtype=jnp.float32,
                                minval=-1.0, maxval=1.0) / jnp.sqrt(H)
    bias = jax.random.uniform(k_b, (H,), dtype=jnp.float32,
                              minval=-1.0, maxval=1.0) / jnp.sqrt(H)

    pooler = jax.jit(pooler_forward)
    out = jax.block_until_ready(pooler(x, weight, bias))

    # Reference check in plain JAX (torch Linear semantics: x @ W.T + b)
    ref = jnp.tanh(x[:, 0, :] @ weight.T + bias)
    assert out.shape == (B, H)
    assert jnp.allclose(out, ref, atol=1e-5, rtol=1e-5)

    print("KERNEL_OK")
</pallas_src>

<mosaic_0001>
module attributes {stable_mosaic.version = 11 : i64} {
  func.func @pooler_kernel(%arg0: i32, %arg1: i32, %arg2: i32, %arg3: memref<2x32xf32, #tpu.memory_space<vmem>>, %arg4: memref<32x32xf32, #tpu.memory_space<vmem>>, %arg5: memref<1x32xf32, #tpu.memory_space<vmem>>, %arg6: memref<2x32xf32, #tpu.memory_space<vmem>>, %arg7: memref<2x32xf32, #tpu.memory_space<vmem>>) attributes {dimension_semantics = [#tpu.dimension_semantics<parallel>, #tpu.dimension_semantics<parallel>, #tpu.dimension_semantics<arbitrary>], iteration_bounds = array<i64: 1, 1, 1>, scalar_prefetch = 0 : i64, scratch_operands = 1 : i64, tpu.core_type = #tpu.core_type<tc>, window_params = [{transform_indices = @transform_0, window_bounds = array<i64: 2, 32>}, {transform_indices = @transform_1, window_bounds = array<i64: 32, 32>}, {transform_indices = @transform_2, window_bounds = array<i64: 1, 32>}, {transform_indices = @transform_3, window_bounds = array<i64: 2, 32>}]} {
    %c0_i32 = arith.constant 0 : i32
    %0 = arith.cmpi eq, %arg2, %c0_i32 : i32
    %1 = arith.extui %0 : i1 to i32
    %c0_i32_0 = arith.constant 0 : i32
    %2 = arith.cmpi ne, %1, %c0_i32_0 : i32
    scf.if %2 {
      %cst_10 = arith.constant 0.000000e+00 : f32
      %12 = vector.broadcast %cst_10 : f32 to vector<2x32xf32>
      %c0_11 = arith.constant 0 : index
      %c0_12 = arith.constant 0 : index
      %13 = vector.load %arg7[%c0_11, %c0_12] : memref<2x32xf32, #tpu.memory_space<vmem>>, vector<2x32xf32>
      tpu.vector_store %arg7[%c0_11, %c0_12], %12 {strides = array<i32>} : memref<2x32xf32, #tpu.memory_space<vmem>>, vector<2x32xf32>,
    } else {
    }
    %c0 = arith.constant 0 : index
    %c0_1 = arith.constant 0 : index
    %3 = vector.load %arg7[%c0, %c0_1] : memref<2x32xf32, #tpu.memory_space<vmem>>, vector<2x32xf32>
    %c0_2 = arith.constant 0 : index
    %c0_3 = arith.constant 0 : index
    %4 = vector.load %arg3[%c0_2, %c0_3] : memref<2x32xf32, #tpu.memory_space<vmem>>, vector<2x32xf32>
    %c0_4 = arith.constant 0 : index
    %c0_5 = arith.constant 0 : index
    %5 = vector.load %arg4[%c0_4, %c0_5] : memref<32x32xf32, #tpu.memory_space<vmem>>, vector<32x32xf32>
    %cst = arith.constant dense<0.000000e+00> : vector<2x32xf32>
    %6 = tpu.matmul %4, %5, %cst {dimension_numbers = #tpu.dot_dimension_numbers<[1], [1], [0], [0], [0, 0, 1, 0], [], []>} : vector<2x32xf32>, vector<32x32xf32>, vector<2x32xf32> -> vector<2x32xf32>
    %7 = arith.addf %3, %6 : vector<2x32xf32>
    %c0_6 = arith.constant 0 : index
    %c0_7 = arith.constant 0 : index
    %8 = vector.load %arg7[%c0_6, %c0_7] : memref<2x32xf32, #tpu.memory_space<vmem>>, vector<2x32xf32>
    tpu.vector_store %arg7[%c0_6, %c0_7], %7 {strides = array<i32>} : memref<2x32xf32, #tpu.memory_space<vmem>>, vector<2x32xf32>,
    %c0_i32_8 = arith.constant 0 : i32
    %9 = arith.cmpi eq, %arg2, %c0_i32_8 : i32
    %10 = arith.extui %9 : i1 to i32
    %c0_i32_9 = arith.constant 0 : i32
    %11 = arith.cmpi ne, %10, %c0_i32_9 : i32
    scf.if %11 {
      %c0_10 = arith.constant 0 : index
      %c0_11 = arith.constant 0 : index
      %12 = vector.load %arg7[%c0_10, %c0_11] : memref<2x32xf32, #tpu.memory_space<vmem>>, vector<2x32xf32>
      %c0_12 = arith.constant 0 : index
      %c0_13 = arith.constant 0 : index
      %13 = vector.load %arg5[%c0_12, %c0_13] : memref<1x32xf32, #tpu.memory_space<vmem>>, vector<1x32xf32>
      %14 = vector.broadcast %13 : vector<1x32xf32> to vector<2x32xf32>
      %15 = arith.addf %12, %14 : vector<2x32xf32>
      %16 = math.tanh %15 : vector<2x32xf32>
      %c0_14 = arith.constant 0 : index
      %c0_15 = arith.constant 0 : index
      %17 = vector.load %arg6[%c0_14, %c0_15] : memref<2x32xf32, #tpu.memory_space<vmem>>, vector<2x32xf32>
      tpu.vector_store %arg6[%c0_14, %c0_15], %16 {strides = array<i32>} : memref<2x32xf32, #tpu.memory_space<vmem>>, vector<2x32xf32>,
    } else {
    }
    return
  }
  func.func @transform_0(%arg0: i32, %arg1: i32, %arg2: i32) -> (i32, i32) {
    %c0_i32 = arith.constant 0 : i32
    return %arg0, %arg2 : i32, i32
  }
  func.func @transform_1(%arg0: i32, %arg1: i32, %arg2: i32) -> (i32, i32) {
    %c0_i32 = arith.constant 0 : i32
    return %arg1, %arg2 : i32, i32
  }
  func.func @transform_2(%arg0: i32, %arg1: i32, %arg2: i32) -> (i32, i32) {
    %c0_i32 = arith.constant 0 : i32
    %c0_i32_0 = arith.constant 0 : i32
    return %c0_i32, %arg1 : i32, i32
  }
  func.func @transform_3(%arg0: i32, %arg1: i32, %arg2: i32) -> (i32, i32) {
    %c0_i32 = arith.constant 0 : i32
    return %arg0, %arg1 : i32, i32
  }
}

</mosaic_0001>

<llo_original>
// kernel: pooler_forward.1
$region0: #{pooler_forward.1}
  #allocation0 [shape = 'u32[]', space=smem, size = 0x4, offset = 0x4, fixed_abs, tag = 'smem constant byte address 0x4 - core index']
  #allocation1 [shape = 'u32[72,128]{1,0:T(1,128)}', space=vmem, size = 0x9000, scoped, tag = 'internal scratch']
  #allocation2 [shape = 'f32[2,32]{1,0:T(2,128)}', space=vmem, size = 0x400, scoped, tag = 'scratch operand']
  %s0 = inlined_call_operand.vmem [shape: f32[2,32], index: 0, kind: input, shape index: {}]
  %s1 = inlined_call_operand.hbm [shape: f32[32,32], index: 1, kind: input, shape index: {}]
  %s2 = inlined_call_operand.vmem [shape: f32[1,32], index: 2, kind: input, shape index: {}]
  %s3 = inlined_call_operand.hbm [shape: f32[2,32], index: 3, kind: output, shape index: {}]
  %s4 = sld [smem:[#allocation0]]
  $region34: #{pooler_forward.1} parent=0
    _
  %s6 = ssub.s32 1, %s4
  %s7 = scalar_select 0, %s6, %s4
  $region1: #{pooler_forward.1} parent=0
    #allocation3 [shape = 'u8[16384]{0}', space=vmem, size = 0x4000, scoped, tag = 'input window, operand 1, single buffered']
    #allocation4 [shape = 's32[1]{0}', space=sflag, size = 0x4, scoped, tag = 'scoped memory for pooler_forward.1']
    #allocation5 [shape = 's32[1]{0}', space=sflag, size = 0x4, scoped, tag = 'scoped memory for pooler_forward.1']
    #allocation6 [shape = 'u8[1024]{0}', space=vmem, size = 0x400, scoped, tag = 'output window, operand 0, single buffered']
    %8 = vsyncpa [#allocation4], 0
    %9 = vsyncpa [#allocation5], 0
    // Predicated region
    $region2: #{pooler_forward.1} parent=1 // pred_check
      _
    $region3: #{pooler_forward.1} parent=1 // pred_check_branch
      %11 = sbr.rel (0) target = $region5
    $region4: #{pooler_forward.1} parent=1 // pred_region
      _
    $region5: #{pooler_forward.1} parent=1 // pred_fallthru
      _
    // Predicated region
    $region6: #{pooler_forward.1} parent=1 // pred_check
      _
    $region7: #{pooler_forward.1} parent=1 // pred_check_branch
      %13 = sbr.rel (0) target = $region9
    $region8: #{pooler_forward.1} parent=1 // pred_region
      %15 = vsyncadd [#allocation4], 0
      %s16 = sshll.u32 %s1, 4
      %s17 = int_to_ptr.hbm [resolvable:$true] %s16
      %s18 = sshll.u32 [#allocation3], 4
      %s19 = int_to_ptr.vmem [resolvable:$true] %s18
      %24 = dma.hbm_to_vmem [thread:$0]  %s17, 512, %s19, [#allocation4], 128, 128, 8
    $region9: #{pooler_forward.1} parent=1 // pred_fallthru
      _
    // Predicated region
    $region10: #{pooler_forward.1} parent=1 // pred_check
      _
    $region11: #{pooler_forward.1} parent=1 // pred_check_branch
      %26 = sbr.rel (0) target = $region13
    $region12: #{pooler_forward.1} parent=1 // pred_region
      _
    $region13: #{pooler_forward.1} parent=1 // pred_fallthru
      _
    // Predicated region
    $region14: #{pooler_forward.1} parent=1 // pred_check
      _
    $region15: #{pooler_forward.1} parent=1 // pred_check_branch
      %28 = sbr.rel (0) target = $region17
    $region16: #{pooler_forward.1} parent=1 // pred_region
      %30 = dma.done [#allocation4], 512
    $region17: #{pooler_forward.1} parent=1 // pred_fallthru
      _
    %p31 = scmp.eq.s32.totalorder 0, 0
    // Predicated region
    $region18: #{pooler_forward.1} parent=1 // pred_check
      %p32 = pneg %p31
    $region19: #{pooler_forward.1} parent=1 // pred_check_branch
      %34 = sbr.rel (%p32) target = $region21
    $region20: #{pooler_forward.1} parent=1 // pred_region
      %vm35 = vcmask 254976
      %36 = vst.msk [vmem:[#allocation2] sm:$0x3] %vm35, 0.0
    $region21: #{pooler_forward.1} parent=1 // pred_fallthru
      _
    %v37 = vld [vmem:[#allocation2] sm:$0x3]
    %v38 = vld [vmem:[%s0] sm:$0x3]
    %v39 = vld [vmem:[#allocation3] sm:$0xff]
    %v40 = vld [vmem:[#allocation3 + $0x8] sm:$0xff]
    %v41 = vld [vmem:[#allocation3 + $0x10] sm:$0xff]
    %v42 = vld [vmem:[#allocation3 + $0x18] sm:$0xff]
    %vm43 = vcmask 261120
    %v45 = vsel %vm43, %v38, 0
    %v48 = vsel %vm43, %v39, 0
    %v51 = vsel %vm43, %v40, 0
    %v54 = vsel %vm43, %v41, 0
    %v57 = vsel %vm43, %v42, 0
    %59 = vmatpush.xpose.msra.mxu0 0.0
    %60 = vmatpush.xpose.msra.mxu0 0.0
    %61 = vmatpush.xpose.msra.mxu0 0.0
    %62 = vmatpush.xpose.msra.mxu0 0.0
    %63 = vmatpush.xpose.msra.mxu0 0.0
    %64 = vmatpush.xpose.msra.mxu0 0.0
    %65 = vmatpush.xpose.msra.mxu0 0.0
    %66 = vmatpush.xpose.msra.mxu0 0.0
    %67 = vmatpush.xpose.msra.mxu0 0.0
    %68 = vmatpush.xpose.msra.mxu0 0.0
    %69 = vmatpush.xpose.msra.mxu0 0.0
    %70 = vmatpush.xpose.msra.mxu0 0.0
    %71 = vmatpush.xpose.msra.mxu0 %v57
    %72 = vmatpush.xpose.msra.mxu0 %v54
    %73 = vmatpush.xpose.msra.mxu0 %v51
    %74 = vmatpush.xpose.msra.mxu0 %v48
    %75 = vmatmul.f32.gmra.mxu0 %v45
    %v76 = vpop.f32.mrf.mxu0
    %v77 = vadd.f32 0.0, %v76
    %78 = vdwg.mxu0
    %v79 = vadd.f32 %v37, %v77
    %vm80 = vcmask 254976
    %81 = vst.msk [vmem:[#allocation2] sm:$0x3] %vm80, %v79
    // Predicated region
    $region22: #{pooler_forward.1} parent=1 // pred_check
      %p82 = pneg %p31
    $region23: #{pooler_forward.1} parent=1 // pred_check_branch
      %84 = sbr.rel (%p82) target = $region25
    $region24: #{pooler_forward.1} parent=1 // pred_region
      %v85 = vld [vmem:[#allocation2] sm:$0x3]
      %v86 = vld [vmem:[%s2] sm:$0x1]
      %v88 = vperm.slane %v86, 0
      %v90 = vadd.f32 %v85, %v88
      %v91 = vtanh.pop %v90
      %92 = vst.msk [vmem:[#allocation6] sm:$0x3] %vm80, %v91
    $region25: #{pooler_forward.1} parent=1 // pred_fallthru
      _
    // Predicated region
    $region26: #{pooler_forward.1} parent=1 // pred_check
      _
    $region27: #{pooler_forward.1} parent=1 // pred_check_branch
      %94 = sbr.rel (0) target = $region29
    $region28: #{pooler_forward.1} parent=1 // pred_region
      %96 = vsyncadd [#allocation5], 0
      %s98 = sshll.u32 [#allocation6], 4
      %s99 = int_to_ptr.vmem [resolvable:$true] %s98
      %s100 = sshll.u32 %s3, 4
      %s101 = int_to_ptr.hbm [resolvable:$true] %s100
      %103 = dma.vmem_to_hbm [thread:$0]  %s99, 32, %s101, [#allocation5]
    $region29: #{pooler_forward.1} parent=1 // pred_fallthru
      _
    // Predicated region
    $region30: #{pooler_forward.1} parent=1 // pred_check
      _
    $region31: #{pooler_forward.1} parent=1 // pred_check_branch
      %105 = sbr.rel (0) target = $region33
    $region32: #{pooler_forward.1} parent=1 // pred_region
      %107 = dma.done [#allocation5], 32
    $region33: #{pooler_forward.1} parent=1 // pred_fallthru
      _
    %108 = vsyncpa [#allocation4], 1
    %109 = vsyncpa [#allocation5], 1

</llo_original>
